<compile_context>
chip_gen: v7x
topology: tpu7x:2x2x1
jax: 0.10.0
libtpu: 0.0.40
codegen_flags: <defaults>
</compile_context>

<pallas_src>
import functools
import math

import jax
import jax.numpy as jnp
from jax.experimental import pallas as pl
from jax.experimental.pallas import tpu as pltpu

_MIB = 1024 * 1024


def _build_pe_table(max_length: int, d_model: int) -> jnp.ndarray:
    """Replicates the PyTorch buffer: shape (max_length, 1, d_model), float32."""
    assert d_model % 2 == 0, "d_model must be even (same limitation as the PyTorch module)"
    position = jnp.arange(0, max_length, dtype=jnp.float32)[:, None]          # (L, 1)
    division_term = jnp.exp(
        jnp.arange(0, d_model, 2, dtype=jnp.float32) * -(math.log(10000.0) / d_model)
    )                                                                          # (D/2,)
    angles = position * division_term                                          # (L, D/2)
    pe = jnp.zeros((max_length, d_model), dtype=jnp.float32)
    pe = pe.at[:, 0::2].set(jnp.sin(angles))
    pe = pe.at[:, 1::2].set(jnp.cos(angles))
    # unsqueeze(0).transpose(0, 1)  ->  (max_length, 1, d_model)
    return pe[:, None, :]


def _pe_add_kernel(x_ref, pe_ref, o_ref, *, batch: int, d_model: int):
    # x_ref / o_ref: (tile_s, batch * d_model)   pe_ref: (tile_s, d_model)
    # Batch broadcast via static column slices; with d_model a multiple of 128
    # every slice is lane-aligned -> unmasked loads/stores, no relayout.
    pe = pe_ref[...]
    for b in range(batch):                       # tiny static loop (batch ~ 2)
        cols = slice(b * d_model, (b + 1) * d_model)
        o_ref[:, cols] = x_ref[:, cols] + pe
    # dropout (eval mode) == identity


def _sublane_multiple(dtype) -> int:
    """Sublane packing count: 8 for 4-byte, 16 for 2-byte, 32 for 1-byte dtypes."""
    itemsize = jnp.dtype(dtype).itemsize
    return max(8, 32 // max(1, itemsize))


def _vmem_and_tile_budget(batch: int) -> tuple[int, int]:
    """Per-generation (vmem_limit_bytes, target x-tile bytes)."""
    try:
        vmem_cap = pltpu.get_tpu_info().vmem_capacity_bytes
    except Exception:
        vmem_cap = 64 * _MIB                      # conservative: v7x per-TC VMEM
    if vmem_cap >= 128 * _MIB:                    # v5e / v6e
        vmem_limit, tile_cap = 96 * _MIB, 16 * _MIB
    else:                                         # v7x (64 MiB physical per TC)
        vmem_limit, tile_cap = 44 * _MIB, 10 * _MIB
    # Double-buffered x-in + x-out + pe tiles must fit:
    #   2 * (x_tile + x_tile + x_tile / batch) <= ~0.9 * vmem_limit
    denom = 4.0 + 2.0 / max(1, batch)
    x_tile_bytes = min(tile_cap, int(0.9 * vmem_limit / denom))
    return vmem_limit, x_tile_bytes


def _choose_tile_s(S: int, batch: int, d_model: int, dtype, x_tile_bytes: int) -> int:
    itemsize = jnp.dtype(dtype).itemsize
    row_bytes = max(1, batch * d_model * itemsize)
    ts = max(1, x_tile_bytes // row_bytes)
    sub = _sublane_multiple(dtype)
    ts = max(sub, (ts // sub) * sub)              # dtype-aware sublane rounding
    return min(S, ts)


def positional_encoding_forward(x: jnp.ndarray, pe: jnp.ndarray,
                                tile_s: int | None = None,
                                donate_x: bool = False) -> jnp.ndarray:
    """x: (S, B, D); pe: (maxLength, 1, D).

    donate_x=True aliases x's HBM buffer to the output.  Only enable it when
    the caller donates x at the jit boundary (donate_argnums) and never reads
    x afterwards; otherwise XLA inserts a defensive full copy of x, which
    costs more than it saves.
    """
    S, B, D = x.shape
    dtype = x.dtype
    itemsize = jnp.dtype(dtype).itemsize

    pe_2d = pe[:S, 0, :].astype(dtype)            # (S, D) glue slice + squeeze
    x_2d = x.reshape(S, B * D)                    # free row-major reshape

    vmem_limit, x_tile_bytes = _vmem_and_tile_budget(B)
    if tile_s is None:
        tile_s = _choose_tile_s(S, B, D, dtype, x_tile_bytes)
    grid = (pl.cdiv(S, tile_s),)

    cost = pl.CostEstimate(
        flops=S * B * D,
        transcendentals=0,
        bytes_accessed=2 * S * B * D * itemsize + S * D * itemsize,
    )

    kernel = functools.partial(_pe_add_kernel, batch=B, d_model=D)

    out_2d = pl.pallas_call(
        kernel,
        out_shape=jax.ShapeDtypeStruct((S, B * D), dtype),
        grid_spec=pltpu.PrefetchScalarGridSpec(
            num_scalar_prefetch=0,
            grid=grid,
            in_specs=[
                pl.BlockSpec((tile_s, B * D), lambda i: (i, 0)),   # x rows
                pl.BlockSpec((tile_s, D), lambda i: (i, 0)),       # pe rows
            ],
            out_specs=pl.BlockSpec((tile_s, B * D), lambda i: (i, 0)),
        ),
        compiler_params=pltpu.CompilerParams(
            # S-tiles are fully independent; shards across TCs where available.
            dimension_semantics=("parallel",),
            vmem_limit_bytes=vmem_limit,
        ),
        input_output_aliases=({0: 0} if donate_x else {}),
        cost_estimate=cost,
    )(x_2d, pe_2d)

    return out_2d.reshape(S, B, D)


if __name__ == "__main__":
    # Small shapes consistent with the module's constants (d_model=512, maxLength=6).
    d_model = 512
    max_length = 6
    seq_len = 6
    batch = 2

    key = jax.random.PRNGKey(0)
    x = jax.random.normal(key, (seq_len, batch, d_model), dtype=jnp.float32)

    pe = _build_pe_table(max_length, d_model)

    ref = x + pe[:seq_len]                        # broadcast over batch, eval dropout = identity

    out = positional_encoding_forward(x, pe)
    out = jax.block_until_ready(out)

    assert out.shape == (seq_len, batch, d_model)
    assert jnp.allclose(out, ref, atol=1e-6), "mismatch vs reference"

    print("KERNEL_OK")
</pallas_src>

<mosaic_0001>
module attributes {stable_mosaic.version = 11 : i64} {
  func.func @_pe_add_kernel(%arg0: i32, %arg1: memref<6x1024xf32, #tpu.memory_space<vmem>>, %arg2: memref<6x512xf32, #tpu.memory_space<vmem>>, %arg3: memref<6x1024xf32, #tpu.memory_space<vmem>>) attributes {dimension_semantics = [#tpu.dimension_semantics<parallel>], iteration_bounds = array<i64: 1>, scalar_prefetch = 0 : i64, scratch_operands = 0 : i64, tpu.core_type = #tpu.core_type<tc>, window_params = [{transform_indices = @transform_0, window_bounds = array<i64: 6, 1024>}, {transform_indices = @transform_1, window_bounds = array<i64: 6, 512>}, {transform_indices = @transform_2, window_bounds = array<i64: 6, 1024>}]} {
    %c0 = arith.constant 0 : index
    %c0_0 = arith.constant 0 : index
    %0 = vector.load %arg2[%c0, %c0_0] : memref<6x512xf32, #tpu.memory_space<vmem>>, vector<6x512xf32>
    %c0_1 = arith.constant 0 : index
    %c0_2 = arith.constant 0 : index
    %1 = vector.load %arg1[%c0_1, %c0_2] : memref<6x1024xf32, #tpu.memory_space<vmem>>, vector<6x512xf32>
    %2 = arith.addf %1, %0 : vector<6x512xf32>
    %c0_3 = arith.constant 0 : index
    %c0_4 = arith.constant 0 : index
    %3 = vector.load %arg3[%c0_3, %c0_4] : memref<6x1024xf32, #tpu.memory_space<vmem>>, vector<6x512xf32>
    tpu.vector_store %arg3[%c0_3, %c0_4], %2 {strides = array<i32>} : memref<6x1024xf32, #tpu.memory_space<vmem>>, vector<6x512xf32>,
    %c0_5 = arith.constant 0 : index
    %c512 = arith.constant 512 : index
    %4 = vector.load %arg1[%c0_5, %c512] : memref<6x1024xf32, #tpu.memory_space<vmem>>, vector<6x512xf32>
    %5 = arith.addf %4, %0 : vector<6x512xf32>
    %c0_6 = arith.constant 0 : index
    %c512_7 = arith.constant 512 : index
    %6 = vector.load %arg3[%c0_6, %c512_7] : memref<6x1024xf32, #tpu.memory_space<vmem>>, vector<6x512xf32>
    tpu.vector_store %arg3[%c0_6, %c512_7], %5 {strides = array<i32>} : memref<6x1024xf32, #tpu.memory_space<vmem>>, vector<6x512xf32>,
    return
  }
  func.func @transform_0(%arg0: i32) -> (i32, i32) {
    %c0_i32 = arith.constant 0 : i32
    %c0_i32_0 = arith.constant 0 : i32
    return %arg0, %c0_i32 : i32, i32
  }
  func.func @transform_1(%arg0: i32) -> (i32, i32) {
    %c0_i32 = arith.constant 0 : i32
    %c0_i32_0 = arith.constant 0 : i32
    return %arg0, %c0_i32 : i32, i32
  }
  func.func @transform_2(%arg0: i32) -> (i32, i32) {
    %c0_i32 = arith.constant 0 : i32
    %c0_i32_0 = arith.constant 0 : i32
    return %arg0, %c0_i32 : i32, i32
  }
}

</mosaic_0001>

<llo_original>
// kernel: tpu_custom_call.1
$region0: #{tpu_custom_call.1}
  #allocation0 [shape = 'u32[]', space=smem, size = 0x4, offset = 0x4, fixed_abs, tag = 'smem constant byte address 0x4 - core index']
  #allocation1 [shape = 'u32[144,128]{1,0:T(1,128)}', space=vmem, size = 0x12000, scoped, tag = 'internal scratch']
  %s0 = inlined_call_operand.hbm [shape: f32[6,1024], index: 0, kind: input, shape index: {}]
  %s1 = inlined_call_operand.hbm [shape: f32[6,512], index: 1, kind: input, shape index: {}]
  %s2 = inlined_call_operand.hbm [shape: f32[6,1024], index: 2, kind: output, shape index: {}]
  %s3 = sld [smem:[#allocation0]]
  $region26: #{tpu_custom_call.1} parent=0
    _
  %s5 = ssub.s32 1, %s3
  %s6 = scalar_select 0, %s5, %s3
  $region1: #{tpu_custom_call.1} parent=0
    #allocation2 [shape = 'u8[32768]{0}', space=vmem, size = 0x8000, scoped, tag = 'input window, operand 0, single buffered']
    #allocation3 [shape = 's32[1]{0}', space=sflag, size = 0x4, scoped, tag = 'scoped memory for tpu_custom_call.1']
    #allocation4 [shape = 's32[1]{0}', space=sflag, size = 0x4, scoped, tag = 'scoped memory for tpu_custom_call.1']
    #allocation5 [shape = 'u8[16384]{0}', space=vmem, size = 0x4000, scoped, tag = 'input window, operand 1, single buffered']
    #allocation6 [shape = 's32[1]{0}', space=sflag, size = 0x4, scoped, tag = 'scoped memory for tpu_custom_call.1']
    #allocation7 [shape = 'u8[32768]{0}', space=vmem, size = 0x8000, scoped, tag = 'output window, operand 0, single buffered']
    %7 = vsyncpa [#allocation3], 0
    %8 = vsyncpa [#allocation6], 0
    %9 = vsyncpa [#allocation4], 0
    // Predicated region
    $region2: #{tpu_custom_call.1} parent=1 // pred_check
      _
    $region3: #{tpu_custom_call.1} parent=1 // pred_check_branch
      %11 = sbr.rel (0) target = $region5
    $region4: #{tpu_custom_call.1} parent=1 // pred_region
      %s13 = ssub.s32 1024, 1024
      %14 = vsyncadd [#allocation3], %s13
      %s16 = sshll.u32 [#allocation2], 4
      %s17 = int_to_ptr.vmem [resolvable:$true] %s16
      %19 = dma.hbm_to_vmem [thread:$0]  %s0, 1024, %s17, [#allocation3]
    $region5: #{tpu_custom_call.1} parent=1 // pred_fallthru
      _
    // Predicated region
    $region6: #{tpu_custom_call.1} parent=1 // pred_check
      _
    $region7: #{tpu_custom_call.1} parent=1 // pred_check_branch
      %21 = sbr.rel (0) target = $region9
    $region8: #{tpu_custom_call.1} parent=1 // pred_region
      %s23 = ssub.s32 512, 512
      %24 = vsyncadd [#allocation6], %s23
      %s26 = sshll.u32 [#allocation5], 4
      %s27 = int_to_ptr.vmem [resolvable:$true] %s26
      %29 = dma.hbm_to_vmem [thread:$0]  %s1, 512, %s27, [#allocation6]
    $region9: #{tpu_custom_call.1} parent=1 // pred_fallthru
      _
    // Predicated region
    $region10: #{tpu_custom_call.1} parent=1 // pred_check
      _
    $region11: #{tpu_custom_call.1} parent=1 // pred_check_branch
      %31 = sbr.rel (0) target = $region13
    $region12: #{tpu_custom_call.1} parent=1 // pred_region
      %32 = dma.done [#allocation3], 1024
    $region13: #{tpu_custom_call.1} parent=1 // pred_fallthru
      _
    // Predicated region
    $region14: #{tpu_custom_call.1} parent=1 // pred_check
      _
    $region15: #{tpu_custom_call.1} parent=1 // pred_check_branch
      %34 = sbr.rel (0) target = $region17
    $region16: #{tpu_custom_call.1} parent=1 // pred_region
      %35 = dma.done [#allocation6], 512
    $region17: #{tpu_custom_call.1} parent=1 // pred_fallthru
      _
    %v36 = vld [vmem:[#allocation5] sm:$0x3f]
    %v37 = vld [vmem:[#allocation5 + $0x8] sm:$0x3f]
    %v38 = vld [vmem:[#allocation5 + $0x10] sm:$0x3f]
    %v39 = vld [vmem:[#allocation5 + $0x18] sm:$0x3f]
    %v40 = vld [vmem:[#allocation2] sm:$0x3f]
    %v41 = vld [vmem:[#allocation2 + $0x8] sm:$0x3f]
    %v42 = vld [vmem:[#allocation2 + $0x10] sm:$0x3f]
    %v43 = vld [vmem:[#allocation2 + $0x18] sm:$0x3f]
    %v44 = vadd.f32 %v40, %v36
    %v45 = vadd.f32 %v41, %v37
    %v46 = vadd.f32 %v42, %v38
    %v47 = vadd.f32 %v43, %v39
    %48 = vst [vmem:[#allocation7] sm:$0x3f] %v44
    %49 = vst [vmem:[#allocation7 + $0x8] sm:$0x3f] %v45
    %50 = vst [vmem:[#allocation7 + $0x10] sm:$0x3f] %v46
    %51 = vst [vmem:[#allocation7 + $0x18] sm:$0x3f] %v47
    %v52 = vld [vmem:[#allocation2 + $0x20] sm:$0x3f]
    %v53 = vld [vmem:[#allocation2 + $0x28] sm:$0x3f]
    %v54 = vld [vmem:[#allocation2 + $0x30] sm:$0x3f]
    %v55 = vld [vmem:[#allocation2 + $0x38] sm:$0x3f]
    %v56 = vadd.f32 %v52, %v36
    %v57 = vadd.f32 %v53, %v37
    %v58 = vadd.f32 %v54, %v38
    %v59 = vadd.f32 %v55, %v39
    %60 = vst [vmem:[#allocation7 + $0x20] sm:$0x3f] %v56
    %61 = vst [vmem:[#allocation7 + $0x28] sm:$0x3f] %v57
    %62 = vst [vmem:[#allocation7 + $0x30] sm:$0x3f] %v58
    %63 = vst [vmem:[#allocation7 + $0x38] sm:$0x3f] %v59
    // Predicated region
    $region18: #{tpu_custom_call.1} parent=1 // pred_check
      _
    $region19: #{tpu_custom_call.1} parent=1 // pred_check_branch
      %65 = sbr.rel (0) target = $region21
    $region20: #{tpu_custom_call.1} parent=1 // pred_region
      %s67 = ssub.s32 1024, 1024
      %68 = vsyncadd [#allocation4], %s67
      %s70 = sshll.u32 [#allocation7], 4
      %s71 = int_to_ptr.vmem [resolvable:$true] %s70
      %73 = dma.vmem_to_hbm [thread:$0]  %s71, 1024, %s2, [#allocation4]
    $region21: #{tpu_custom_call.1} parent=1 // pred_fallthru
      _
    // Predicated region
    $region22: #{tpu_custom_call.1} parent=1 // pred_check
      _
    $region23: #{tpu_custom_call.1} parent=1 // pred_check_branch
      %75 = sbr.rel (0) target = $region25
    $region24: #{tpu_custom_call.1} parent=1 // pred_region
      %76 = dma.done [#allocation4], 1024
    $region25: #{tpu_custom_call.1} parent=1 // pred_fallthru
      _
    %77 = vsyncpa [#allocation3], 1
    %78 = vsyncpa [#allocation6], 1
    %79 = vsyncpa [#allocation4], 1

</llo_original>
